<compile_context>
chip_gen: v7x
topology: tpu7x:2x2x1
jax: 0.10.0
libtpu: 0.0.40
codegen_flags: <defaults>
</compile_context>

<pallas_src>
import math

import jax
import jax.numpy as jnp
from jax.experimental import pallas as pl
from jax.experimental.pallas import tpu as pltpu


_VMEM_LIMIT_BYTES = 48 * 1024 * 1024   # > v5e/v6e scoped defaults, < v7x 64 MiB physical
_BLOCK_BYTES_BUDGET = 4 * 1024 * 1024  # per-buffer budget; x+out+pe double-buffered stays under limit


def _build_pe(d_model: int, max_len: int = 49, dtype=jnp.float32) -> jnp.ndarray:
    """Deterministic sinusoidal positional-encoding buffer, shape (1, max_len, d_model)."""
    position = jnp.arange(0, max_len, dtype=jnp.float32)[:, None]            # (max_len, 1)
    div_term = jnp.exp(
        jnp.arange(0, d_model, 2, dtype=jnp.float32) * (-math.log(10000.0) / d_model)
    )                                                                         # (ceil(d/2),)
    angles = position * div_term                                              # (max_len, ceil(d/2))
    pe = jnp.zeros((max_len, d_model), dtype=jnp.float32)
    pe = pe.at[:, 0::2].set(jnp.sin(angles))
    pe = pe.at[:, 1::2].set(jnp.cos(angles)[:, : d_model // 2])
    return pe[None, :, :].astype(dtype)                                       # (1, max_len, d_model)


def _add_flat_kernel(x_ref, pe_ref, o_ref):
    # x_ref / o_ref: (tB, S*D); pe_ref: (1, S*D) broadcast over the batch rows.
    o_ref[...] = x_ref[...] + pe_ref[...]


def _add_tiled_kernel(x_ref, pe_ref, o_ref):
    # x_ref / o_ref: (tS, D) (batch axis squeezed away); pe_ref: (tS, D).
    o_ref[...] = x_ref[...] + pe_ref[...]


def _round_down_to(x: int, m: int) -> int:
    return max(m, (x // m) * m)


@jax.jit
def positional_encoding(x: jnp.ndarray, pe: jnp.ndarray) -> jnp.ndarray:
    """x: (B, S, D); pe: (1, max_len, D).  Returns x + pe[:, :S, :] (same dtype as x)."""
    B, S, D = x.shape
    itemsize = jnp.dtype(x.dtype).itemsize
    pe_slice = pe[0, :S, :].astype(x.dtype)   # (S, D) static-slice glue, matches x dtype

    if D % 128 != 0 and (S * D) % 128 == 0:
        # ---- Lane-dense path: fold S into the lane axis (last dim = S*D, multiple of 128).
        SD = S * D
        x_flat = x.reshape(B, SD)
        pe_flat = pe_slice.reshape(1, SD)

        rows_budget = _BLOCK_BYTES_BUDGET // (SD * itemsize)
        if B <= max(rows_budget, 1):
            tb = B                                   # whole batch in one slab (full dim -> no 8-align need)
        else:
            tb = _round_down_to(min(rows_budget, B), 8)
        nb = pl.cdiv(B, tb)

        out_flat = pl.pallas_call(
            _add_flat_kernel,
            out_shape=jax.ShapeDtypeStruct((B, SD), x.dtype),
            grid=(nb,),
            in_specs=[
                pl.BlockSpec((tb, SD), lambda b: (b, 0)),
                pl.BlockSpec((1, SD), lambda b: (0, 0)),   # constant index -> pe DMA'd once
            ],
            out_specs=pl.BlockSpec((tb, SD), lambda b: (b, 0)),
            compiler_params=pltpu.CompilerParams(
                dimension_semantics=("parallel",),
                vmem_limit_bytes=_VMEM_LIMIT_BYTES,
            ),
        )(x_flat, pe_flat)
        return out_flat.reshape(B, S, D)

    # ---- General path: D is the full last dim (lane-dense whenever D % 128 == 0);
    #      tile the sequence axis to VMEM-sized, 8-aligned blocks.
    rows_budget = _BLOCK_BYTES_BUDGET // (D * itemsize)
    if S <= max(rows_budget, 1):
        ts = S                                             # full dim -> no 8-align requirement
    else:
        ts = _round_down_to(min(rows_budget, S), 8)
    ns = pl.cdiv(S, ts)

    return pl.pallas_call(
        _add_tiled_kernel,
        out_shape=jax.ShapeDtypeStruct((B, S, D), x.dtype),
        grid=(ns, B),                                      # S-tile outer, batch inner:
        in_specs=[                                         # pe re-DMA'd only when the S-tile changes
            pl.BlockSpec((pl.Squeezed(), ts, D), lambda s, b: (b, s, 0)),
            pl.BlockSpec((ts, D), lambda s, b: (s, 0)),
        ],
        out_specs=pl.BlockSpec((pl.Squeezed(), ts, D), lambda s, b: (b, s, 0)),
        compiler_params=pltpu.CompilerParams(
            dimension_semantics=("parallel", "parallel"),  # lets v7x shard across its 2 TCs
            vmem_limit_bytes=_VMEM_LIMIT_BYTES,
        ),
    )(x, pe_slice)


if __name__ == "__main__":
    # Small shapes consistent with the module: batch=2, seq=8, d_model=32, max_len=49.
    B, S, D, MAX_LEN = 2, 8, 32, 49

    key = jax.random.PRNGKey(0)
    x = jax.random.normal(key, (B, S, D), dtype=jnp.float32)
    pe = _build_pe(D, MAX_LEN, dtype=x.dtype)

    out = positional_encoding(x, pe)
    out = jax.block_until_ready(out)

    ref = x + pe[:, :S, :]
    assert out.shape == (B, S, D)
    assert jnp.allclose(out, ref, atol=1e-6, rtol=1e-6)

    # Also exercise the general (lane-dense D, S-tiled) path with d_model = 128.
    D2 = 128
    x2 = jax.random.normal(jax.random.PRNGKey(1), (B, S, D2), dtype=jnp.float32)
    pe2 = _build_pe(D2, MAX_LEN, dtype=x2.dtype)
    out2 = jax.block_until_ready(positional_encoding(x2, pe2))
    ref2 = x2 + pe2[:, :S, :]
    assert jnp.allclose(out2, ref2, atol=1e-6, rtol=1e-6)

    print("KERNEL_OK")
</pallas_src>

<mosaic_0001>
module attributes {stable_mosaic.version = 11 : i64} {
  func.func @_add_flat_kernel(%arg0: i32, %arg1: memref<2x256xf32, #tpu.memory_space<vmem>>, %arg2: memref<1x256xf32, #tpu.memory_space<vmem>>, %arg3: memref<2x256xf32, #tpu.memory_space<vmem>>) attributes {dimension_semantics = [#tpu.dimension_semantics<parallel>], iteration_bounds = array<i64: 1>, scalar_prefetch = 0 : i64, scratch_operands = 0 : i64, tpu.core_type = #tpu.core_type<tc>, window_params = [{transform_indices = @transform_0, window_bounds = array<i64: 2, 256>}, {pipeline_mode = #tpu.pipeline_mode<synchronous>, transform_indices = @transform_1, window_bounds = array<i64: 1, 256>}, {transform_indices = @transform_2, window_bounds = array<i64: 2, 256>}]} {
    %c0 = arith.constant 0 : index
    %c0_0 = arith.constant 0 : index
    %0 = vector.load %arg1[%c0, %c0_0] : memref<2x256xf32, #tpu.memory_space<vmem>>, vector<2x256xf32>
    %c0_1 = arith.constant 0 : index
    %c0_2 = arith.constant 0 : index
    %1 = vector.load %arg2[%c0_1, %c0_2] : memref<1x256xf32, #tpu.memory_space<vmem>>, vector<1x256xf32>
    %2 = vector.broadcast %1 : vector<1x256xf32> to vector<2x256xf32>
    %3 = arith.addf %0, %2 : vector<2x256xf32>
    %c0_3 = arith.constant 0 : index
    %c0_4 = arith.constant 0 : index
    %4 = vector.load %arg3[%c0_3, %c0_4] : memref<2x256xf32, #tpu.memory_space<vmem>>, vector<2x256xf32>
    tpu.vector_store %arg3[%c0_3, %c0_4], %3 {strides = array<i32>} : memref<2x256xf32, #tpu.memory_space<vmem>>, vector<2x256xf32>,
    return
  }
  func.func @transform_0(%arg0: i32) -> (i32, i32) {
    %c0_i32 = arith.constant 0 : i32
    %c0_i32_0 = arith.constant 0 : i32
    return %arg0, %c0_i32 : i32, i32
  }
  func.func @transform_1(%arg0: i32) -> (i32, i32) {
    %c0_i32 = arith.constant 0 : i32
    %c0_i32_0 = arith.constant 0 : i32
    %c0_i32_1 = arith.constant 0 : i32
    return %c0_i32, %c0_i32_0 : i32, i32
  }
  func.func @transform_2(%arg0: i32) -> (i32, i32) {
    %c0_i32 = arith.constant 0 : i32
    %c0_i32_0 = arith.constant 0 : i32
    return %arg0, %c0_i32 : i32, i32
  }
}

</mosaic_0001>

<llo_original>
// kernel: squeeze.1
$region0: #{squeeze.1}
  %s0 = inlined_call_operand.vmem [shape: f32[1,8,32], index: 0, kind: input, shape index: {}]
  %s1 = inlined_call_operand.vmem [shape: f32[1,256], index: 1, kind: output, shape index: {}]
  $region1: #{squeeze.1} parent=0
    #allocation0 [shape = 'u8[8192]{0}', space=vmem, size = 0x2000, scoped, tag = 'scoped mem for output reshape']
    %s2 = smov 3
    %v3 = vld [vmem:[%s0] ss:$4 sm:%s2]
    %vm4 = vcmask 261120
    %5 = vst.msk [vmem:[#allocation0] ss:$8 sm:$0x3] %vm4, %v3
    %s6 = scalar_lea.vmem %s0, 3
    %s7 = smov 3
    %v8 = vld [vmem:[%s6] ss:$4 sm:%s7]
    %9 = vrot.lane.b32.xlu0 %v8, 96
    %v10 = vpop.permute.xlu0 %9
    %vm11 = vcmask 1048320
    %12 = vst.msk [vmem:[#allocation0] ss:$8 sm:$0x3] %vm11, %v10
    %s13 = scalar_lea.vmem %s0, 2
    %s14 = smov 3
    %v15 = vld [vmem:[%s13] ss:$4 sm:%s14]
    %16 = vrot.lane.b32.xlu0 %v15, 64
    %v17 = vpop.permute.xlu0 %16
    %vm18 = vcmask 785920
    %19 = vst.msk [vmem:[#allocation0] ss:$8 sm:$0x3] %vm18, %v17
    %s20 = scalar_lea.vmem %s0, 1
    %s21 = smov 3
    %v22 = vld [vmem:[%s20] ss:$4 sm:%s21]
    %23 = vrot.lane.b32.xlu0 %v22, 32
    %v24 = vpop.permute.xlu0 %23
    %vm25 = vcmask 523520
    %26 = vst.msk [vmem:[#allocation0] ss:$8 sm:$0x3] %vm25, %v24
    %s28 = sshllo.u32 0, 1
    %v30 = vld [vmem:[#allocation0] sm:%s28]
    %s31 = sshllo.u32 0, 1
    %32 = vst [vmem:[%s1] sm:%s31] %v30
    %s33 = scalar_lea.vmem [#allocation0], 8
    %v34 = vld [vmem:[%s33] sm:%s28]
    %s35 = sshllo.u32 0, 1
    %s36 = scalar_lea.vmem %s1, 1
    %37 = vst [vmem:[%s36] sm:%s35] %v34

// kernel: positional_encoding.1
$region0: #{positional_encoding.1}
  #allocation0 [shape = 'u32[]', space=smem, size = 0x4, offset = 0x4, fixed_abs, tag = 'smem constant byte address 0x4 - core index']
  #allocation1 [shape = 'u32[144,128]{1,0:T(1,128)}', space=vmem, size = 0x12000, scoped, tag = 'internal scratch']
  %s0 = inlined_call_operand.vmem [shape: f32[2,256], index: 0, kind: input, shape index: {}]
  %s1 = inlined_call_operand.vmem [shape: f32[1,256], index: 1, kind: input, shape index: {}]
  %s2 = inlined_call_operand.vmem [shape: f32[2,256], index: 2, kind: output, shape index: {}]
  %s3 = sld [smem:[#allocation0]]
  $region18: #{positional_encoding.1} parent=0
    _
  %s5 = ssub.s32 1, %s3
  %s6 = scalar_select 0, %s5, %s3
  // Predicated region
  $region2: #{positional_encoding.1} parent=0 // pred_check
    _
  $region3: #{positional_encoding.1} parent=0 // pred_check_branch
    %8 = sbr.rel (0) target = $region5
  $region4: #{positional_encoding.1} parent=0 // pred_region
    _
  $region5: #{positional_encoding.1} parent=0 // pred_fallthru
    _
  // Predicated region
  $region6: #{positional_encoding.1} parent=0 // pred_check
    _
  $region7: #{positional_encoding.1} parent=0 // pred_check_branch
    %10 = sbr.rel (0) target = $region9
  $region8: #{positional_encoding.1} parent=0 // pred_region
    _
  $region9: #{positional_encoding.1} parent=0 // pred_fallthru
    _
  %v11 = vld [vmem:[%s0] sm:$0xf]
  %v12 = vld [vmem:[%s1] sm:$0x3]
  %v14 = vlaneseq
  %v15 = vshrl.u32 %v14, 7
  %v16 = vsub.s32 0, %v15
  %v17 = vrot.slane %v12, %v16
  %v18 = vlaneseq
  %v19 = vshrl.u32 %v18, 7
  %v20 = vsub.s32 1, %v19
  %v21 = vrot.slane %v12, %v20
  %v22 = vcombine.low %v17, %v21
  %v24 = vunpack.c.l.s4 1983009808
  %v25 = vunpack.c.0.s8 %v24
  %v26 = vlaneseq
  %v27 = vshrl.u32 %v26, 7
  %v28 = vsub.s32 %v25, %v27
  %v29 = vrot.slane %v22, %v28
  %v31 = vadd.f32 %v11, %v29
  %32 = vst [vmem:[%s2] sm:$0xf] %v31
  // Predicated region
  $region10: #{positional_encoding.1} parent=0 // pred_check
    _
  $region11: #{positional_encoding.1} parent=0 // pred_check_branch
    %34 = sbr.rel (0) target = $region13
  $region12: #{positional_encoding.1} parent=0 // pred_region
    _
  $region13: #{positional_encoding.1} parent=0 // pred_fallthru
    _
  // Predicated region
  $region14: #{positional_encoding.1} parent=0 // pred_check
    _
  $region15: #{positional_encoding.1} parent=0 // pred_check_branch
    %36 = sbr.rel (0) target = $region17
  $region16: #{positional_encoding.1} parent=0 // pred_region
    _
  $region17: #{positional_encoding.1} parent=0 // pred_fallthru
    _

</llo_original>
